<compile_context>
chip_gen: v6e
topology: v6e:2x2x1
jax: 0.10.0
libtpu: 0.0.40
codegen_flags: <defaults>
</compile_context>

<pallas_src>
import functools

import jax
import jax.numpy as jnp
from jax import lax
from jax.experimental import pallas as pl
from jax.experimental.pallas import tpu as pltpu


def _patch_softmax_kernel(x_ref, o_ref):
    """x_ref: (1, P, TR, LANE) tile; o_ref: (1, TR, LANE).

    Every lane is an independent softmax group of size P (one (pixel, channel)
    slot of one patch). The reduction runs over vreg-sized (<=8, sub_l)
    sub-chunks so the accumulators and (for small P) all P slabs stay in
    registers: pure VPU/EUP work, no accumulator VMEM round-trips.
    """
    _, P, TR, LANE = x_ref.shape
    f32 = jnp.float32

    if P <= 16:
        # Fused single-read path: keep P slabs + ~4 f32 accumulators < ~56 vregs.
        sub_l = LANE
        while sub_l > 128 and (P + 4) * (sub_l // 128) > 56:
            sub_l //= 2
    else:
        # Two-pass path: only the accumulators need to stay resident.
        sub_l = min(LANE, 512)

    for l0 in range(0, LANE, sub_l):
        for r0 in range(0, TR, 8):
            rs = min(8, TR - r0)

            if P <= 16:
                # Load each slab exactly once (native dtype; bf16 max is exact).
                slabs = [x_ref[0, p, r0:r0 + rs, l0:l0 + sub_l] for p in range(P)]
                m = slabs[0]
                for p in range(1, P):
                    m = jnp.maximum(m, slabs[p])
                m = m.astype(f32)
                num = jnp.zeros((rs, sub_l), f32)
                den = jnp.zeros((rs, sub_l), f32)
                for p in range(P):
                    v = slabs[p].astype(f32)
                    e = jnp.exp(v - m)              # stable: v - m <= 0
                    den = den + e
                    num = num + v * e
            else:
                # Large P: two passes; the second read hits VMEM, not HBM.
                def _max_body(p, acc):
                    return jnp.maximum(acc, x_ref[0, p, r0:r0 + rs, l0:l0 + sub_l])
                m = lax.fori_loop(1, P, _max_body,
                                  x_ref[0, 0, r0:r0 + rs, l0:l0 + sub_l],
                                  unroll=4).astype(f32)

                def _acc_body(p, carry):
                    num, den = carry
                    v = x_ref[0, p, r0:r0 + rs, l0:l0 + sub_l].astype(f32)
                    e = jnp.exp(v - m)
                    return num + v * e, den + e
                num, den = lax.fori_loop(
                    0, P, _acc_body,
                    (jnp.zeros((rs, sub_l), f32), jnp.zeros((rs, sub_l), f32)),
                    unroll=4)

            # den >= 1 (the max term contributes exp(0)=1): approx reciprocal on
            # the EUP + one Newton step is ~1e-7 relative error.
            r = pl.reciprocal(den, approx=True)
            r = r * (2.0 - den * r)
            o_ref[0, r0:r0 + rs, l0:l0 + sub_l] = (num * r).astype(o_ref.dtype)


def _pick_tiling(M, P, itemsize, batch, budget_bytes=2 << 20, min_steps=4):
    """Fold the N*C axis into lane-dense (rows, lane) tiles.

    lane is a multiple of 128 (padding M up if necessary) so every load/store is
    unmasked; tr is a multiple of 8 dividing rows (or the full rows extent) that
    keeps the (P, tr, lane) input tile around ~2 MiB, while leaving enough grid
    steps for pipelining / v7x megacore balance.
    Returns (lane, rows, tr, m_pad) with m_pad = rows * lane >= M.
    """
    lane = next((c for c in (512, 256, 128) if M % c == 0), 128)
    rows = -(-M // lane)
    if rows % 8 and P * rows * lane * itemsize > budget_bytes:
        rows = -(-rows // 8) * 8          # pad rows so an 8-row tile exists
    divs8 = [d for d in range(8, rows + 1, 8) if rows % d == 0]
    fitting = [d for d in divs8 if P * d * lane * itemsize <= budget_bytes]
    if fitting:
        balanced = [d for d in fitting if batch * (rows // d) >= min_steps]
        tr = max(balanced) if balanced else max(fitting)
    elif P * rows * lane * itemsize <= budget_bytes:
        tr = rows                          # full extent: always legal, fits
    else:
        tr = min(divs8) if divs8 else rows
    return lane, rows, tr, rows * lane


@functools.partial(jax.jit, static_argnums=(1,))
def patch_embedding(x, patch_size):
    """x: (B, C, H, W) -> (B, (H//ps)*(W//ps), C), softmax-weighted patch flatten."""
    B, C, H, W = x.shape
    ps = patch_size
    assert H % ps == 0 and W % ps == 0
    h, w = H // ps, W // ps
    N, P = h * w, ps * ps
    M = N * C
    itemsize = jnp.dtype(x.dtype).itemsize

    lane, rows, tr, m_pad = _pick_tiling(M, P, itemsize, B)

    # rearrange 'b c (h p1) (w p2) -> b (p1 p2) (h w c)', pad the folded axis so
    # it splits into lane-dense (rows, lane) tiles. allow_input_fusion below asks
    # XLA to fuse this into the pallas_call operand (no standalone HBM round-trip).
    xr = x.reshape(B, C, h, ps, w, ps)
    xr = xr.transpose(0, 3, 5, 2, 4, 1)          # b p1 p2 h w c
    xr = xr.reshape(B, P, M)
    if m_pad != M:
        xr = jnp.pad(xr, ((0, 0), (0, 0), (0, m_pad - M)))
    xr = xr.reshape(B, P, rows, lane)

    grid = (B, rows // tr)

    out = pl.pallas_call(
        _patch_softmax_kernel,
        out_shape=jax.ShapeDtypeStruct((B, rows, lane), x.dtype),
        grid_spec=pltpu.PrefetchScalarGridSpec(
            num_scalar_prefetch=0,
            grid=grid,
            in_specs=[pl.BlockSpec((1, P, tr, lane), lambda b, t: (b, 0, t, 0))],
            out_specs=pl.BlockSpec((1, tr, lane), lambda b, t: (b, t, 0)),
        ),
        compiler_params=pltpu.CompilerParams(
            dimension_semantics=("parallel", "parallel"),
            allow_input_fusion=[True],
            vmem_limit_bytes=32 * 1024 * 1024,
        ),
        cost_estimate=pl.CostEstimate(
            flops=5 * B * P * m_pad + 5 * B * m_pad,
            transcendentals=B * P * m_pad + B * m_pad,
            bytes_accessed=(B * P * m_pad + B * m_pad) * itemsize,
        ),
    )(xr)

    # (B, rows, lane) is (B, N*C [+pad]) in row-major order.
    out = out.reshape(B, m_pad)
    if m_pad != M:
        out = out[:, :M]
    return out.reshape(B, N, C)


def _reference(x, patch_size):
    """Pure-JAX replica of the PyTorch forward for verification."""
    B, C, H, W = x.shape
    ps = patch_size
    h, w = H // ps, W // ps
    xr = x.reshape(B, C, h, ps, w, ps)
    xr = xr.transpose(0, 2, 4, 1, 3, 5).reshape(B, h * w, C, ps * ps)
    wgt = jax.nn.softmax(xr, axis=-1)
    return (xr * wgt).sum(axis=-1)


if __name__ == "__main__":
    key = jax.random.PRNGKey(0)
    B, C, H, W = 2, 4, 16, 16
    patch_size = 2
    x = jax.random.normal(key, (B, C, H, W), dtype=jnp.float32)

    out = patch_embedding(x, patch_size)
    out = jax.block_until_ready(out)

    ref = _reference(x, patch_size)
    assert out.shape == (B, (H // patch_size) * (W // patch_size), C)
    assert jnp.allclose(out, ref, atol=1e-5, rtol=1e-5)

    print("KERNEL_OK")
</pallas_src>

<mosaic_0001>
module attributes {stable_mosaic.version = 11 : i64} {
  func.func @_patch_softmax_kernel(%arg0: i32, %arg1: i32, %arg2: memref<1x4x1x256xf32, #tpu.memory_space<vmem>>, %arg3: memref<1x1x256xf32, #tpu.memory_space<vmem>>) attributes {dimension_semantics = [#tpu.dimension_semantics<parallel>, #tpu.dimension_semantics<parallel>], iteration_bounds = array<i64: 2, 1>, scalar_prefetch = 0 : i64, scratch_operands = 0 : i64, tpu.core_type = #tpu.core_type<tc>, window_params = [{transform_indices = @transform_0, window_bounds = array<i64: 1, 4, 1, 256>}, {transform_indices = @transform_1, window_bounds = array<i64: 1, 1, 256>}]} {
    %c0 = arith.constant 0 : index
    %c0_0 = arith.constant 0 : index
    %c0_1 = arith.constant 0 : index
    %c0_2 = arith.constant 0 : index
    %0 = vector.load %arg2[%c0, %c0_0, %c0_1, %c0_2] : memref<1x4x1x256xf32, #tpu.memory_space<vmem>>, vector<1x1x1x256xf32>
    %1 = vector.shape_cast %0 : vector<1x1x1x256xf32> to vector<1x256xf32>
    %c0_3 = arith.constant 0 : index
    %c1 = arith.constant 1 : index
    %c0_4 = arith.constant 0 : index
    %c0_5 = arith.constant 0 : index
    %2 = vector.load %arg2[%c0_3, %c1, %c0_4, %c0_5] : memref<1x4x1x256xf32, #tpu.memory_space<vmem>>, vector<1x1x1x256xf32>
    %3 = vector.shape_cast %2 : vector<1x1x1x256xf32> to vector<1x256xf32>
    %c0_6 = arith.constant 0 : index
    %c2 = arith.constant 2 : index
    %c0_7 = arith.constant 0 : index
    %c0_8 = arith.constant 0 : index
    %4 = vector.load %arg2[%c0_6, %c2, %c0_7, %c0_8] : memref<1x4x1x256xf32, #tpu.memory_space<vmem>>, vector<1x1x1x256xf32>
    %5 = vector.shape_cast %4 : vector<1x1x1x256xf32> to vector<1x256xf32>
    %c0_9 = arith.constant 0 : index
    %c3 = arith.constant 3 : index
    %c0_10 = arith.constant 0 : index
    %c0_11 = arith.constant 0 : index
    %6 = vector.load %arg2[%c0_9, %c3, %c0_10, %c0_11] : memref<1x4x1x256xf32, #tpu.memory_space<vmem>>, vector<1x1x1x256xf32>
    %7 = vector.shape_cast %6 : vector<1x1x1x256xf32> to vector<1x256xf32>
    %8 = arith.maximumf %1, %3 : vector<1x256xf32>
    %9 = arith.maximumf %8, %5 : vector<1x256xf32>
    %10 = arith.maximumf %9, %7 : vector<1x256xf32>
    %cst = arith.constant 0.000000e+00 : f32
    %11 = vector.broadcast %cst : f32 to vector<1x256xf32>
    %cst_12 = arith.constant 0.000000e+00 : f32
    %12 = vector.broadcast %cst_12 : f32 to vector<1x256xf32>
    %13 = arith.subf %1, %10 : vector<1x256xf32>
    %14 = math.exp %13 : vector<1x256xf32>
    %15 = arith.addf %12, %14 : vector<1x256xf32>
    %16 = arith.mulf %1, %14 : vector<1x256xf32>
    %17 = arith.addf %11, %16 : vector<1x256xf32>
    %18 = arith.subf %3, %10 : vector<1x256xf32>
    %19 = math.exp %18 : vector<1x256xf32>
    %20 = arith.addf %15, %19 : vector<1x256xf32>
    %21 = arith.mulf %3, %19 : vector<1x256xf32>
    %22 = arith.addf %17, %21 : vector<1x256xf32>
    %23 = arith.subf %5, %10 : vector<1x256xf32>
    %24 = math.exp %23 : vector<1x256xf32>
    %25 = arith.addf %20, %24 : vector<1x256xf32>
    %26 = arith.mulf %5, %24 : vector<1x256xf32>
    %27 = arith.addf %22, %26 : vector<1x256xf32>
    %28 = arith.subf %7, %10 : vector<1x256xf32>
    %29 = math.exp %28 : vector<1x256xf32>
    %30 = arith.addf %25, %29 : vector<1x256xf32>
    %31 = arith.mulf %7, %29 : vector<1x256xf32>
    %32 = arith.addf %27, %31 : vector<1x256xf32>
    %33 = tpu.reciprocal %30 {approx = true} : vector<1x256xf32> -> vector<1x256xf32>
    %34 = arith.mulf %30, %33 : vector<1x256xf32>
    %cst_13 = arith.constant 2.000000e+00 : f32
    %35 = vector.broadcast %cst_13 : f32 to vector<1x256xf32>
    %36 = arith.subf %35, %34 : vector<1x256xf32>
    %37 = arith.mulf %33, %36 : vector<1x256xf32>
    %38 = arith.mulf %32, %37 : vector<1x256xf32>
    %c0_14 = arith.constant 0 : index
    %c0_15 = arith.constant 0 : index
    %c0_16 = arith.constant 0 : index
    %39 = vector.load %arg3[%c0_14, %c0_15, %c0_16] : memref<1x1x256xf32, #tpu.memory_space<vmem>>, vector<1x1x256xf32>
    %40 = vector.shape_cast %39 : vector<1x1x256xf32> to vector<1x256xf32>
    %41 = vector.shape_cast %38 : vector<1x256xf32> to vector<1x1x256xf32>
    tpu.vector_store %arg3[%c0_14, %c0_15, %c0_16], %41 {strides = array<i32>} : memref<1x1x256xf32, #tpu.memory_space<vmem>>, vector<1x1x256xf32>,
    return
  }
  func.func @transform_0(%arg0: i32, %arg1: i32) -> (i32, i32, i32, i32) {
    %c0_i32 = arith.constant 0 : i32
    %c0_i32_0 = arith.constant 0 : i32
    %c0_i32_1 = arith.constant 0 : i32
    return %arg0, %c0_i32, %arg1, %c0_i32_0 : i32, i32, i32, i32
  }
  func.func @transform_1(%arg0: i32, %arg1: i32) -> (i32, i32, i32) {
    %c0_i32 = arith.constant 0 : i32
    %c0_i32_0 = arith.constant 0 : i32
    return %arg0, %arg1, %c0_i32 : i32, i32, i32
  }
}

</mosaic_0001>

<llo_original>
// kernel: patch_embedding.1
$region0: #{patch_embedding.1}
  #allocation0 [shape = 'u32[]', space=smem, size = 0x4, offset = 0x4, fixed_abs, tag = 'smem constant byte address 0x4 - core index']
  #allocation1 [shape = 'u32[144,128]{1,0:T(1,128)}', space=vmem, size = 0x12000, scoped, tag = 'internal scratch']
  %s0 = inlined_call_operand.vmem [shape: f32[2,4,1,256], index: 0, kind: input, shape index: {}]
  %s1 = inlined_call_operand.vmem [shape: f32[2,1,256], index: 1, kind: output, shape index: {}]
  %s2 = sld [smem:[#allocation0]]
  $region37: #{patch_embedding.1} parent=0
    _
  %s4 = ssub.s32 1, %s2
  %s5 = scalar_select 0, %s4, %s2
  loop: start=0, step=1, limit=4
  $region2: #{patch_embedding.1} parent=0 // loop_pre_header
    _
  $region3: #{patch_embedding.1} parent=0 // loop_header
    %s7 = sphi 0, %s11
    %p8 = scmp.ge.s32.totalorder %s7, 4
    %s14 = sphi 0, %s26
    %s15 = sphi 0, %s22
    %s16 = sphi 0, %s14
    %s17 = sphi 0, %s15
    %s18 = sphi 0, %s16
    %s19 = sphi 0, %s17
    %s31 = sphi 0, %s33
    %s34 = sphi 0, %s31
    %s35 = sphi 0, %s34
    %s51 = sphi 0, %s35
    %s59 = sphi 0, %s61
    %s62 = sphi 0, %s59
    %s63 = sphi 0, %s62
    %s79 = sphi 0, %s63
  $region4: #{patch_embedding.1} parent=0 // loop_header_branch
    %10 = sbr.rel (%p8) target = $region8
  $region5: #{patch_embedding.1} parent=0 // loop_body
    %s12 = ssub.s32 %s7, 1
    %s13 = ssub.s32 %s7, 2
    %s20 = sadd.s32 1, %s15
    %p21 = scmp.ge.s32.totalorder %s20, 1
    %s22 = scalar_select %p21, 0, %s20
    %s23 = sadd.s32 1, %s14
    %s24 = scalar_select %p21, %s23, %s14
    %p25 = scmp.ge.s32.totalorder %s24, 2
    %s26 = scalar_select %p25, 0, %s24
    %s27 = ssub.s32 %s14, %s26
    %s28 = ssub.s32 %s15, %s22
    %s29 = sor.u32 %s27, %s28
    %p30 = scmp.eq.s32.totalorder %s29, 0
    %s32 = sadd.s32 %s31, 1
    %s33 = scalar_select %p30, %s31, %s32
    %p36 = pneg %p30
    %p37 = scmp.eq.s32.totalorder %s7, 1
    %p38 = por %p36, %p37
    %p39 = scmp.ne.s32.totalorder %s31, %s34
    %p40 = scmp.eq.s32.totalorder %s7, 0
    %p41 = por %p39, %p40
    %p42 = scmp.ne.s32.totalorder %s31, %s34
    %p43 = scmp.eq.s32.totalorder %s12, 1
    %p44 = por %p42, %p43
    %p45 = scmp.ne.s32.totalorder %s34, %s35
    %p46 = scmp.eq.s32.totalorder %s12, 0
    %p47 = por %p45, %p46
    %p48 = scmp.ne.s32.totalorder %s34, %s35
    %p49 = scmp.eq.s32.totalorder %s13, 1
    %p50 = por %p48, %p49
    %p52 = scmp.ne.s32.totalorder %s35, %s51
    %p53 = scmp.eq.s32.totalorder %s13, 0
    %p54 = por %p52, %p53
    %s55 = ssub.s32 %s14, %s26
    %s56 = ssub.s32 %s15, %s22
    %s57 = sor.u32 %s55, %s56
    %p58 = scmp.eq.s32.totalorder %s57, 0
    %s60 = sadd.s32 %s59, 1
    %s61 = scalar_select %p58, %s59, %s60
    %p64 = pneg %p58
    %p65 = scmp.eq.s32.totalorder %s7, 1
    %p66 = por %p64, %p65
    %p67 = scmp.ne.s32.totalorder %s59, %s62
    %p68 = scmp.eq.s32.totalorder %s7, 0
    %p69 = por %p67, %p68
    %p70 = scmp.ne.s32.totalorder %s59, %s62
    %p71 = scmp.eq.s32.totalorder %s12, 1
    %p72 = por %p70, %p71
    %p73 = scmp.ne.s32.totalorder %s62, %s63
    %p74 = scmp.eq.s32.totalorder %s12, 0
    %p75 = por %p73, %p74
    %p76 = scmp.ne.s32.totalorder %s62, %s63
    %p77 = scmp.eq.s32.totalorder %s13, 1
    %p78 = por %p76, %p77
    %p80 = scmp.ne.s32.totalorder %s63, %s79
    %p81 = scmp.eq.s32.totalorder %s13, 0
    %p82 = por %p80, %p81
    %p83 = scmp.le.s32.totalorder 1, %s7
    %p84 = scmp.lt.s32.totalorder %s7, 3
    %p85 = pnand %p83, %p84
    %p86 = pneg %p85
    // Predicated region
    $region9: #{patch_embedding.1} parent=5 // pred_check
      _
    $region10: #{patch_embedding.1} parent=5 // pred_check_branch
      %88 = sbr.rel (%p85) target = $region12
    $region11: #{patch_embedding.1} parent=5 // pred_region
      %s89 = ssub.s32 %s7, 1
    $region12: #{patch_embedding.1} parent=5 // pred_fallthru
      _
    %p90 = scmp.lt.s32.totalorder %s7, 2
    // Predicated region
    $region13: #{patch_embedding.1} parent=5 // pred_check
      %p91 = pneg %p90
    $region14: #{patch_embedding.1} parent=5 // pred_check_branch
      %93 = sbr.rel (%p91) target = $region16
    $region15: #{patch_embedding.1} parent=5 // pred_region
      // Predicated region
      $region17: #{patch_embedding.1} parent=15 // pred_check
        %p94 = pneg %p41
      $region18: #{patch_embedding.1} parent=15 // pred_check_branch
        %96 = sbr.rel (%p94) target = $region20
      $region19: #{patch_embedding.1} parent=15 // pred_region
        %p97 = scmp.lt.s32.totalorder %s14, 1
        %s98 = scalar_select %p97, %s14, 1
        %p99 = scmp.lt.s32.totalorder %s15, 0
        %s100 = scalar_select %p99, %s15, 0
        %s101 = smul.addr %s100, 2
        %s102 = smul.addr %s98, 8
        %s103 = sadd.s32 %s101, %s102
        %s104 = scalar_lea.vmem %s0, %s103
      $region20: #{patch_embedding.1} parent=15 // pred_fallthru
        _
    $region16: #{patch_embedding.1} parent=5 // pred_fallthru
      _
    %p105 = scmp.le.s32.totalorder 1, %s7
    %p106 = scmp.lt.s32.totalorder %s7, 3
    %p107 = pnand %p105, %p106
    %p108 = pneg %p107
    // Predicated region
    $region21: #{patch_embedding.1} parent=5 // pred_check
      _
    $region22: #{patch_embedding.1} parent=5 // pred_check_branch
      %110 = sbr.rel (%p107) target = $region24
    $region23: #{patch_embedding.1} parent=5 // pred_region
      %s111 = ssub.s32 %s7, 1
      %p112 = scmp.lt.s32.totalorder %s16, 1
      %s113 = scalar_select %p112, %s16, 1
      %p114 = scmp.lt.s32.totalorder %s17, 0
      %s115 = scalar_select %p114, %s17, 0
      %s116 = smul.addr %s115, 2
      %s117 = smul.addr %s113, 8
      %s118 = sadd.s32 %s116, %s117
      %s119 = scalar_lea.vmem %s0, %s118
      %p120 = pneg %p47
      %p121 = pneg %p44
      %p122 = pneg %p75
      %p123 = pneg %p72
      %p124 = scmp.lt.s32.totalorder %s16, 1
      %s125 = scalar_select %p124, %s16, 1
      %p126 = scmp.lt.s32.totalorder %s17, 0
      %s127 = scalar_select %p126, %s17, 0
      %s128 = smul.addr %s127, 2
      %s129 = smul.addr %s125, 2
      %s130 = sadd.s32 %s128, %s129
      %s131 = scalar_lea.vmem %s1, %s130
      %p132 = scmp.lt.s32.totalorder %s16, 1
      %s133 = scalar_select %p132, %s16, 1
      %p134 = scmp.lt.s32.totalorder %s17, 0
      %s135 = scalar_select %p134, %s17, 0
      %s136 = smul.addr %s135, 2
      %s137 = smul.addr %s133, 8
      %s138 = sadd.s32 %s136, %s137
      %s139 = scalar_lea.vmem %s0, %s138
      %p140 = scmp.lt.s32.totalorder %s16, 1
      %s141 = scalar_select %p140, %s16, 1
      %p142 = scmp.lt.s32.totalorder %s17, 0
      %s143 = scalar_select %p142, %s17, 0
      %s144 = smul.addr %s143, 2
      %s145 = smul.addr %s141, 2
      %s146 = sadd.s32 %s144, %s145
      %s147 = scalar_lea.vmem %s1, %s146
      %v148 = vld [vmem:[%s139] sm:$0x3]
      %s149 = scalar_lea.vmem %s139, 2
      %v150 = vld [vmem:[%s149] sm:$0x3]
      %s151 = scalar_lea.vmem %s139, 4
      %v152 = vld [vmem:[%s151] sm:$0x3]
      %s153 = scalar_lea.vmem %s139, 6
      %v154 = vld [vmem:[%s153] sm:$0x3]
      %v155 = vmax.f32 %v148, %v150
      %v156 = vmax.f32 %v155, %v152
      %v157 = vmax.f32 %v156, %v154
      %v158 = vsub.f32 %v148, %v157
      %v159 = vmul.f32 %v158, 1.442695
      %v160 = vpow.pop %v159
      %v161 = vadd.f32 %v160, 0.0
      %v162 = vmul.f32 %v148, %v160
      %v163 = vadd.f32 %v162, 0.0
      %v164 = vsub.f32 %v150, %v157
      %v165 = vmul.f32 %v164, 1.442695
      %v166 = vpow.pop %v165
      %v167 = vadd.f32 %v161, %v166
      %v168 = vmul.f32 %v150, %v166
      %v169 = vadd.f32 %v163, %v168
      %v170 = vsub.f32 %v152, %v157
      %v171 = vmul.f32 %v170, 1.442695
      %v172 = vpow.pop %v171
      %v173 = vadd.f32 %v167, %v172
      %v174 = vmul.f32 %v152, %v172
      %v175 = vadd.f32 %v169, %v174
      %v176 = vsub.f32 %v154, %v157
      %v177 = vmul.f32 %v176, 1.442695
      %v178 = vpow.pop %v177
      %v179 = vadd.f32 %v173, %v178
      %v180 = vmul.f32 %v154, %v178
      %v181 = vadd.f32 %v175, %v180
      %v182 = vrcp.pop %v179
      %v183 = vmul.f32 %v179, %v182
      %v184 = vsub.f32 2.0, %v183
      %v185 = vmul.f32 %v182, %v184
      %v186 = vmul.f32 %v181, %v185
      %v187 = vlaneseq
      %vm188 = vcmp.ge.s32.totalorder %v187, 0
      %vm189 = vcmp.lt.s32.totalorder %v187, 256
      %vm190 = vmand %vm188, %vm189
      %191 = vst.msk [vmem:[%s147] sm:$0x3] %vm190, %v186
      %p192 = scmp.lt.s32.totalorder %s16, 1
      %s193 = scalar_select %p192, %s16, 1
      %p194 = scmp.lt.s32.totalorder %s17, 0
      %s195 = scalar_select %p194, %s17, 0
      %s196 = smul.addr %s195, 2
      %s197 = smul.addr %s193, 2
      %s198 = sadd.s32 %s196, %s197
      %s199 = scalar_lea.vmem %s1, %s198
      // Predicated region
      $region25: #{patch_embedding.1} parent=23 // pred_check
        %p200 = pneg %p72
      $region26: #{patch_embedding.1} parent=23 // pred_check_branch
        %202 = sbr.rel (%p200) target = $region28
      $region27: #{patch_embedding.1} parent=23 // pred_region
        _
      $region28: #{patch_embedding.1} parent=23 // pred_fallthru
        _
    $region24: #{patch_embedding.1} parent=5 // pred_fallthru
      _
    %p203 = scmp.le.s32.totalorder 2, %s7
    // Predicated region
    $region29: #{patch_embedding.1} parent=5 // pred_check
      %p204 = pneg %p203
    $region30: #{patch_embedding.1} parent=5 // pred_check_branch
      %206 = sbr.rel (%p204) target = $region32
    $region31: #{patch_embedding.1} parent=5 // pred_region
      %s207 = ssub.s32 %s7, 2
      // Predicated region
      $region33: #{patch_embedding.1} parent=31 // pred_check
        %p208 = pneg %p78
      $region34: #{patch_embedding.1} parent=31 // pred_check_branch
        %210 = sbr.rel (%p208) target = $region36
      $region35: #{patch_embedding.1} parent=31 // pred_region
        %p211 = scmp.lt.s32.totalorder %s18, 1
        %s212 = scalar_select %p211, %s18, 1
        %p213 = scmp.lt.s32.totalorder %s19, 0
        %s214 = scalar_select %p213, %s19, 0
        %s215 = smul.addr %s214, 2
        %s216 = smul.addr %s212, 2
        %s217 = sadd.s32 %s215, %s216
        %s218 = scalar_lea.vmem %s1, %s217
      $region36: #{patch_embedding.1} parent=31 // pred_fallthru
        _
    $region32: #{patch_embedding.1} parent=5 // pred_fallthru
      _
  $region6: #{patch_embedding.1} parent=0 // loop_footer
    %s11 = sadd.s32 1, %s7
  $region7: #{patch_embedding.1} parent=0 // loop_footer_branch
    %6 = sbr.rel target = $region3
  $region8: #{patch_embedding.1} parent=0 // loop_exit
    _

</llo_original>
